<compile_context>
chip_gen: v7x
topology: tpu7x:2x2x1
jax: 0.10.0
libtpu: 0.0.40
codegen_flags: <defaults>
</compile_context>

<pallas_src>
import functools

import jax
import jax.numpy as jnp
from jax.experimental import pallas as pl
from jax.experimental.pallas import tpu as pltpu


_VMEM_LIMIT = 48 * 1024 * 1024   # safe on v5e/v6e (128 MiB phys) and v7x (64 MiB phys)
_ROW_TILE_TARGET = 512           # (n, c) rows per block
_COL_TILE_TARGET = 2048          # flattened-spatial lanes per block


def _pick_tile(total, align, target):
    """Largest multiple of `align` that divides `total` and is <= target.

    Falls back to the full extent (always a legal block size) when `total`
    is not a multiple of `align`.
    """
    if total <= align or total % align != 0:
        return total
    best = align
    t = align
    cap = min(total, max(target, align))
    while t <= cap:
        if total % t == 0:
            best = t
        t += align
    return best


# ---------------------------------------------------------------------------
# Kernel 1: global average pool of |x| over the spatial axis.
#   in : x2   (N*C, H*W)   tiled (TR, TC); spatial axis is a reduction.
#   out: gap  (N*C, 1)     float32   (lane width 1 is tiny -> acceptable)
# ---------------------------------------------------------------------------
def _gap_abs_kernel(x_ref, o_ref, acc_ref, *, inv_hw):
    k = pl.program_id(1)

    @pl.when(k == 0)
    def _():
        acc_ref[...] = jnp.zeros_like(acc_ref)

    xa = jnp.abs(x_ref[...].astype(jnp.float32))
    acc_ref[...] += jnp.sum(xa, axis=-1, keepdims=True)

    @pl.when(k == pl.num_programs(1) - 1)
    def _():
        o_ref[...] = acc_ref[...] * inv_hw


# ---------------------------------------------------------------------------
# Kernel 2: the FC path producing the per-(n, c) threshold.
#   thresh = avg * sigmoid(W2 @ relu(BN(W1 @ avg + b1)) + b2)
# BatchNorm1d is evaluated with batch statistics (training-mode forward, the
# default state of a freshly constructed nn.Module), eps = 1e-5, biased var.
# Weights arrive pre-transposed (w1.T, w2.T) so no in-kernel XLU transpose.
# This path is O(N*C^2) -> a single tiny block.
# ---------------------------------------------------------------------------
def _fc_kernel(avg_ref, w1t_ref, b1_ref, g_ref, beta_ref, w2t_ref, b2_ref, o_ref):
    avg = avg_ref[...]                                          # (N, C) f32
    # Linear 1: y = x @ W^T + b   (W^T passed in)
    h = jnp.dot(avg, w1t_ref[...], preferred_element_type=jnp.float32) + b1_ref[...]
    # BatchNorm1d (training-mode batch stats)
    mu = jnp.mean(h, axis=0, keepdims=True)
    var = jnp.mean((h - mu) ** 2, axis=0, keepdims=True)
    h = (h - mu) * jax.lax.rsqrt(var + 1e-5) * g_ref[...] + beta_ref[...]
    # ReLU
    h = jnp.maximum(h, 0.0)
    # Linear 2 + Sigmoid
    s = jax.nn.sigmoid(
        jnp.dot(h, w2t_ref[...], preferred_element_type=jnp.float32) + b2_ref[...]
    )
    o_ref[...] = avg * s


# ---------------------------------------------------------------------------
# Kernel 3: soft thresholding (elementwise, mem-bound).
#   out = sign(x) * max(|x| - th, 0)  ==  x - clip(x, -th, th)   (th >= 0)
#   in : x2     (N*C, H*W)  tiled (TR, TC)
#        thresh (N*C, 1)    (TR, 1) block, broadcast over lanes
# ---------------------------------------------------------------------------
def _shrink_kernel(x_ref, th_ref, o_ref):
    x = x_ref[...].astype(jnp.float32)
    th = th_ref[...]                                            # (TR, 1)
    o_ref[...] = (x - jnp.clip(x, -th, th)).astype(o_ref.dtype)


# ---------------------------------------------------------------------------
# Host-side wrapper
# ---------------------------------------------------------------------------
def init_shrinkage_params(key, channel):
    """Deterministic synthetic parameters (shapes from Shrinkage.__init__)."""
    k1, k2, k3, k4 = jax.random.split(key, 4)
    bound = 1.0 / jnp.sqrt(channel)
    w1 = jax.random.uniform(k1, (channel, channel), jnp.float32, -bound, bound)
    b1 = jax.random.uniform(k2, (channel,), jnp.float32, -bound, bound)
    gamma = jnp.ones((channel,), jnp.float32)       # BatchNorm1d weight
    beta = jnp.zeros((channel,), jnp.float32)       # BatchNorm1d bias
    w2 = jax.random.uniform(k3, (channel, channel), jnp.float32, -bound, bound)
    b2 = jax.random.uniform(k4, (channel,), jnp.float32, -bound, bound)
    return (w1, b1, gamma, beta, w2, b2)


@jax.jit
def shrinkage_forward(x, params):
    N, C, H, W = x.shape
    NC, HW = N * C, H * W
    w1, b1, gamma, beta, w2, b2 = params

    x2 = x.reshape(NC, HW)

    # Tile sizes: multiples of (8, 128) that divide the extents, capped so the
    # double-buffered f32 working set per kernel stays a few MiB (fits v7x's
    # 64 MiB VMEM with headroom while amortizing per-grid-step overhead).
    tr = _pick_tile(NC, 8, _ROW_TILE_TARGET)
    tc = _pick_tile(HW, 128, _COL_TILE_TARGET)
    nr, ncol = NC // tr, HW // tc

    # --- kernel 1: GAP of |x| (rows parallel, spatial axis reduced) -----------
    gap = pl.pallas_call(
        functools.partial(_gap_abs_kernel, inv_hw=1.0 / HW),
        out_shape=jax.ShapeDtypeStruct((NC, 1), jnp.float32),
        grid=(nr, ncol),
        in_specs=[pl.BlockSpec((tr, tc), lambda i, k: (i, k))],
        out_specs=pl.BlockSpec((tr, 1), lambda i, k: (i, 0)),
        scratch_shapes=[pltpu.VMEM((tr, 1), jnp.float32)],
        compiler_params=pltpu.CompilerParams(
            dimension_semantics=("parallel", "arbitrary"),
            vmem_limit_bytes=_VMEM_LIMIT,
        ),
    )(x2)
    avg = gap.reshape(N, C)

    # --- kernel 2: FC path (Linear -> BN -> ReLU -> Linear -> Sigmoid) --------
    thresh = pl.pallas_call(
        _fc_kernel,
        out_shape=jax.ShapeDtypeStruct((N, C), jnp.float32),
        grid=(1,),
        in_specs=[
            pl.BlockSpec((N, C), lambda i: (0, 0)),
            pl.BlockSpec((C, C), lambda i: (0, 0)),
            pl.BlockSpec((1, C), lambda i: (0, 0)),
            pl.BlockSpec((1, C), lambda i: (0, 0)),
            pl.BlockSpec((1, C), lambda i: (0, 0)),
            pl.BlockSpec((C, C), lambda i: (0, 0)),
            pl.BlockSpec((1, C), lambda i: (0, 0)),
        ],
        out_specs=pl.BlockSpec((N, C), lambda i: (0, 0)),
        compiler_params=pltpu.CompilerParams(
            dimension_semantics=("arbitrary",),
            vmem_limit_bytes=_VMEM_LIMIT,
        ),
    )(
        avg,
        w1.T,                       # pre-transposed in the wrapper (tiny)
        b1.reshape(1, C),
        gamma.reshape(1, C),
        beta.reshape(1, C),
        w2.T,
        b2.reshape(1, C),
    )

    # --- kernel 3: soft threshold (fully elementwise, both axes parallel) -----
    out2 = pl.pallas_call(
        _shrink_kernel,
        out_shape=jax.ShapeDtypeStruct((NC, HW), x.dtype),
        grid=(nr, ncol),
        in_specs=[
            pl.BlockSpec((tr, tc), lambda i, j: (i, j)),
            pl.BlockSpec((tr, 1), lambda i, j: (i, 0)),
        ],
        out_specs=pl.BlockSpec((tr, tc), lambda i, j: (i, j)),
        input_output_aliases={0: 0},          # reuse x's buffer for the output
        compiler_params=pltpu.CompilerParams(
            dimension_semantics=("parallel", "parallel"),
            vmem_limit_bytes=_VMEM_LIMIT,
        ),
    )(x2, thresh.reshape(NC, 1))

    return out2.reshape(N, C, H, W)


# Pure-JAX reference (same math) for a sanity check.
def shrinkage_reference(x, params):
    w1, b1, gamma, beta, w2, b2 = params
    x_abs = jnp.abs(x.astype(jnp.float32))
    avg = jnp.mean(x_abs, axis=(2, 3))                          # (N, C)
    h = avg @ w1.T + b1
    mu = jnp.mean(h, axis=0, keepdims=True)
    var = jnp.mean((h - mu) ** 2, axis=0, keepdims=True)
    h = (h - mu) / jnp.sqrt(var + 1e-5) * gamma + beta
    h = jnp.maximum(h, 0.0)
    s = jax.nn.sigmoid(h @ w2.T + b2)
    th = (avg * s)[:, :, None, None]
    n_sub = jnp.maximum(x_abs - th, 0.0)
    return (jnp.sign(x.astype(jnp.float32)) * n_sub).astype(x.dtype)


if __name__ == "__main__":
    key = jax.random.PRNGKey(0)
    kx, kp = jax.random.split(key)

    N, C, H, W = 2, 4, 16, 16          # gap_size = 1 (required by Linear(C, C))
    x = jax.random.normal(kx, (N, C, H, W), dtype=jnp.float32)
    params = init_shrinkage_params(kp, C)

    out = shrinkage_forward(x, params)
    out = jax.block_until_ready(out)

    ref = shrinkage_reference(x, params)
    assert out.shape == (N, C, H, W)
    assert jnp.allclose(out, ref, atol=1e-5, rtol=1e-5)

    print("KERNEL_OK")
</pallas_src>

<mosaic_0001>
module attributes {stable_mosaic.version = 11 : i64} {
  func.func @_gap_abs_kernel(%arg0: i32, %arg1: i32, %arg2: memref<8x256xf32, #tpu.memory_space<vmem>>, %arg3: memref<8x1xf32, #tpu.memory_space<vmem>>, %arg4: memref<8x1xf32, #tpu.memory_space<vmem>>) attributes {dimension_semantics = [#tpu.dimension_semantics<parallel>, #tpu.dimension_semantics<arbitrary>], iteration_bounds = array<i64: 1, 1>, scalar_prefetch = 0 : i64, scratch_operands = 1 : i64, tpu.core_type = #tpu.core_type<tc>, window_params = [{transform_indices = @transform_0, window_bounds = array<i64: 8, 256>}, {transform_indices = @transform_1, window_bounds = array<i64: 8, 1>}]} {
    %c0_i32 = arith.constant 0 : i32
    %0 = arith.cmpi eq, %arg1, %c0_i32 : i32
    %1 = arith.extui %0 : i1 to i32
    %c0_i32_0 = arith.constant 0 : i32
    %2 = arith.cmpi ne, %1, %c0_i32_0 : i32
    scf.if %2 {
      %cst_8 = arith.constant 0.000000e+00 : f32
      %13 = vector.broadcast %cst_8 : f32 to vector<8x1xf32>
      %c0_9 = arith.constant 0 : index
      %c0_10 = arith.constant 0 : index
      %14 = vector.load %arg4[%c0_9, %c0_10] : memref<8x1xf32, #tpu.memory_space<vmem>>, vector<8x1xf32>
      tpu.vector_store %arg4[%c0_9, %c0_10], %13 {strides = array<i32>} : memref<8x1xf32, #tpu.memory_space<vmem>>, vector<8x1xf32>,
    } else {
    }
    %c0 = arith.constant 0 : index
    %c0_1 = arith.constant 0 : index
    %3 = vector.load %arg2[%c0, %c0_1] : memref<8x256xf32, #tpu.memory_space<vmem>>, vector<8x256xf32>
    %4 = math.absf %3 : vector<8x256xf32>
    %c0_2 = arith.constant 0 : index
    %c0_3 = arith.constant 0 : index
    %5 = vector.load %arg4[%c0_2, %c0_3] : memref<8x1xf32, #tpu.memory_space<vmem>>, vector<8x1xf32>
    %cst = arith.constant dense<0.000000e+00> : vector<8xf32>
    %6 = vector.multi_reduction <add>, %4, %cst [1] : vector<8x256xf32> to vector<8xf32>
    %7 = vector.shape_cast %6 : vector<8xf32> to vector<8x1xf32>
    %8 = arith.addf %5, %7 : vector<8x1xf32>
    %c0_4 = arith.constant 0 : index
    %c0_5 = arith.constant 0 : index
    %9 = vector.load %arg4[%c0_4, %c0_5] : memref<8x1xf32, #tpu.memory_space<vmem>>, vector<8x1xf32>
    tpu.vector_store %arg4[%c0_4, %c0_5], %8 {strides = array<i32>} : memref<8x1xf32, #tpu.memory_space<vmem>>, vector<8x1xf32>,
    %c0_i32_6 = arith.constant 0 : i32
    %10 = arith.cmpi eq, %arg1, %c0_i32_6 : i32
    %11 = arith.extui %10 : i1 to i32
    %c0_i32_7 = arith.constant 0 : i32
    %12 = arith.cmpi ne, %11, %c0_i32_7 : i32
    scf.if %12 {
      %c0_8 = arith.constant 0 : index
      %c0_9 = arith.constant 0 : index
      %13 = vector.load %arg4[%c0_8, %c0_9] : memref<8x1xf32, #tpu.memory_space<vmem>>, vector<8x1xf32>
      %cst_10 = arith.constant 3.906250e-03 : f32
      %14 = vector.broadcast %cst_10 : f32 to vector<8x1xf32>
      %15 = arith.mulf %13, %14 : vector<8x1xf32>
      %c0_11 = arith.constant 0 : index
      %c0_12 = arith.constant 0 : index
      %16 = vector.load %arg3[%c0_11, %c0_12] : memref<8x1xf32, #tpu.memory_space<vmem>>, vector<8x1xf32>
      tpu.vector_store %arg3[%c0_11, %c0_12], %15 {strides = array<i32>} : memref<8x1xf32, #tpu.memory_space<vmem>>, vector<8x1xf32>,
    } else {
    }
    return
  }
  func.func @transform_0(%arg0: i32, %arg1: i32) -> (i32, i32) {
    %c0_i32 = arith.constant 0 : i32
    return %arg0, %arg1 : i32, i32
  }
  func.func @transform_1(%arg0: i32, %arg1: i32) -> (i32, i32) {
    %c0_i32 = arith.constant 0 : i32
    %c0_i32_0 = arith.constant 0 : i32
    return %arg0, %c0_i32 : i32, i32
  }
}

module attributes {stable_mosaic.version = 11 : i64} {
  func.func @_fc_kernel(%arg0: i32, %arg1: memref<2x4xf32, #tpu.memory_space<vmem>>, %arg2: memref<4x4xf32, #tpu.memory_space<vmem>>, %arg3: memref<1x4xf32, #tpu.memory_space<vmem>>, %arg4: memref<1x4xf32, #tpu.memory_space<vmem>>, %arg5: memref<1x4xf32, #tpu.memory_space<vmem>>, %arg6: memref<4x4xf32, #tpu.memory_space<vmem>>, %arg7: memref<1x4xf32, #tpu.memory_space<vmem>>, %arg8: memref<2x4xf32, #tpu.memory_space<vmem>>) attributes {dimension_semantics = [#tpu.dimension_semantics<arbitrary>], iteration_bounds = array<i64: 1>, scalar_prefetch = 0 : i64, scratch_operands = 0 : i64, tpu.core_type = #tpu.core_type<tc>, window_params = [{pipeline_mode = #tpu.pipeline_mode<synchronous>, transform_indices = @transform_0, window_bounds = array<i64: 2, 4>}, {pipeline_mode = #tpu.pipeline_mode<synchronous>, transform_indices = @transform_1, window_bounds = array<i64: 4, 4>}, {pipeline_mode = #tpu.pipeline_mode<synchronous>, transform_indices = @transform_2, window_bounds = array<i64: 1, 4>}, {pipeline_mode = #tpu.pipeline_mode<synchronous>, transform_indices = @transform_3, window_bounds = array<i64: 1, 4>}, {pipeline_mode = #tpu.pipeline_mode<synchronous>, transform_indices = @transform_4, window_bounds = array<i64: 1, 4>}, {pipeline_mode = #tpu.pipeline_mode<synchronous>, transform_indices = @transform_5, window_bounds = array<i64: 4, 4>}, {pipeline_mode = #tpu.pipeline_mode<synchronous>, transform_indices = @transform_6, window_bounds = array<i64: 1, 4>}, {pipeline_mode = #tpu.pipeline_mode<synchronous>, transform_indices = @transform_7, window_bounds = array<i64: 2, 4>}]} {
    %c0 = arith.constant 0 : index
    %c0_0 = arith.constant 0 : index
    %0 = vector.load %arg1[%c0, %c0_0] : memref<2x4xf32, #tpu.memory_space<vmem>>, vector<2x4xf32>
    %c0_1 = arith.constant 0 : index
    %c0_2 = arith.constant 0 : index
    %1 = vector.load %arg2[%c0_1, %c0_2] : memref<4x4xf32, #tpu.memory_space<vmem>>, vector<4x4xf32>
    %cst = arith.constant dense<0.000000e+00> : vector<2x4xf32>
    %2 = tpu.matmul %0, %1, %cst {dimension_numbers = #tpu.dot_dimension_numbers<[1], [0], [0], [1], [0, 0, 1, 1], [], []>} : vector<2x4xf32>, vector<4x4xf32>, vector<2x4xf32> -> vector<2x4xf32>
    %c0_3 = arith.constant 0 : index
    %c0_4 = arith.constant 0 : index
    %3 = vector.load %arg3[%c0_3, %c0_4] : memref<1x4xf32, #tpu.memory_space<vmem>>, vector<1x4xf32>
    %4 = vector.broadcast %3 : vector<1x4xf32> to vector<2x4xf32>
    %5 = arith.addf %2, %4 : vector<2x4xf32>
    %cst_5 = arith.constant dense<0.000000e+00> : vector<4xf32>
    %6 = vector.multi_reduction <add>, %5, %cst_5 [0] : vector<2x4xf32> to vector<4xf32>
    %7 = vector.shape_cast %6 : vector<4xf32> to vector<1x4xf32>
    %cst_6 = arith.constant 2.000000e+00 : f32
    %8 = vector.broadcast %cst_6 : f32 to vector<1x4xf32>
    %9 = arith.divf %7, %8 : vector<1x4xf32>
    %10 = vector.broadcast %9 : vector<1x4xf32> to vector<2x4xf32>
    %11 = arith.subf %5, %10 : vector<2x4xf32>
    %12 = arith.mulf %11, %11 : vector<2x4xf32>
    %cst_7 = arith.constant dense<0.000000e+00> : vector<4xf32>
    %13 = vector.multi_reduction <add>, %12, %cst_7 [0] : vector<2x4xf32> to vector<4xf32>
    %14 = vector.shape_cast %13 : vector<4xf32> to vector<1x4xf32>
    %cst_8 = arith.constant 2.000000e+00 : f32
    %15 = vector.broadcast %cst_8 : f32 to vector<1x4xf32>
    %16 = arith.divf %14, %15 : vector<1x4xf32>
    %17 = vector.broadcast %9 : vector<1x4xf32> to vector<2x4xf32>
    %18 = arith.subf %5, %17 : vector<2x4xf32>
    %cst_9 = arith.constant 9.99999974E-6 : f32
    %19 = vector.broadcast %cst_9 : f32 to vector<1x4xf32>
    %20 = arith.addf %16, %19 : vector<1x4xf32>
    %21 = math.rsqrt %20 : vector<1x4xf32>
    %22 = vector.broadcast %21 : vector<1x4xf32> to vector<2x4xf32>
    %23 = arith.mulf %18, %22 : vector<2x4xf32>
    %c0_10 = arith.constant 0 : index
    %c0_11 = arith.constant 0 : index
    %24 = vector.load %arg4[%c0_10, %c0_11] : memref<1x4xf32, #tpu.memory_space<vmem>>, vector<1x4xf32>
    %25 = vector.broadcast %24 : vector<1x4xf32> to vector<2x4xf32>
    %26 = arith.mulf %23, %25 : vector<2x4xf32>
    %c0_12 = arith.constant 0 : index
    %c0_13 = arith.constant 0 : index
    %27 = vector.load %arg5[%c0_12, %c0_13] : memref<1x4xf32, #tpu.memory_space<vmem>>, vector<1x4xf32>
    %28 = vector.broadcast %27 : vector<1x4xf32> to vector<2x4xf32>
    %29 = arith.addf %26, %28 : vector<2x4xf32>
    %cst_14 = arith.constant 0.000000e+00 : f32
    %30 = vector.broadcast %cst_14 : f32 to vector<2x4xf32>
    %31 = arith.maximumf %29, %30 : vector<2x4xf32>
    %c0_15 = arith.constant 0 : index
    %c0_16 = arith.constant 0 : index
    %32 = vector.load %arg6[%c0_15, %c0_16] : memref<4x4xf32, #tpu.memory_space<vmem>>, vector<4x4xf32>
    %cst_17 = arith.constant dense<0.000000e+00> : vector<2x4xf32>
    %33 = tpu.matmul %31, %32, %cst_17 {dimension_numbers = #tpu.dot_dimension_numbers<[1], [0], [0], [1], [0, 0, 1, 1], [], []>} : vector<2x4xf32>, vector<4x4xf32>, vector<2x4xf32> -> vector<2x4xf32>
    %c0_18 = arith.constant 0 : index
    %c0_19 = arith.constant 0 : index
    %34 = vector.load %arg7[%c0_18, %c0_19] : memref<1x4xf32, #tpu.memory_space<vmem>>, vector<1x4xf32>
    %35 = vector.broadcast %34 : vector<1x4xf32> to vector<2x4xf32>
    %36 = arith.addf %33, %35 : vector<2x4xf32>
    %37 = arith.negf %36 : vector<2x4xf32>
    %38 = math.exp %37 : vector<2x4xf32>
    %cst_20 = arith.constant 1.000000e+00 : f32
    %39 = vector.broadcast %cst_20 : f32 to vector<2x4xf32>
    %40 = arith.addf %39, %38 : vector<2x4xf32>
    %41 = arith.divf %39, %40 : vector<2x4xf32>
    %42 = arith.mulf %0, %41 : vector<2x4xf32>
    %c0_21 = arith.constant 0 : index
    %c0_22 = arith.constant 0 : index
    %43 = vector.load %arg8[%c0_21, %c0_22] : memref<2x4xf32, #tpu.memory_space<vmem>>, vector<2x4xf32>
    tpu.vector_store %arg8[%c0_21, %c0_22], %42 {strides = array<i32>} : memref<2x4xf32, #tpu.memory_space<vmem>>, vector<2x4xf32>,
    return
  }
  func.func @transform_0(%arg0: i32) -> (i32, i32) {
    %c0_i32 = arith.constant 0 : i32
    %c0_i32_0 = arith.constant 0 : i32
    %c0_i32_1 = arith.constant 0 : i32
    return %c0_i32, %c0_i32_0 : i32, i32
  }
  func.func @transform_1(%arg0: i32) -> (i32, i32) {
    %c0_i32 = arith.constant 0 : i32
    %c0_i32_0 = arith.constant 0 : i32
    %c0_i32_1 = arith.constant 0 : i32
    return %c0_i32, %c0_i32_0 : i32, i32
  }
  func.func @transform_2(%arg0: i32) -> (i32, i32) {
    %c0_i32 = arith.constant 0 : i32
    %c0_i32_0 = arith.constant 0 : i32
    %c0_i32_1 = arith.constant 0 : i32
    return %c0_i32, %c0_i32_0 : i32, i32
  }
  func.func @transform_3(%arg0: i32) -> (i32, i32) {
    %c0_i32 = arith.constant 0 : i32
    %c0_i32_0 = arith.constant 0 : i32
    %c0_i32_1 = arith.constant 0 : i32
    return %c0_i32, %c0_i32_0 : i32, i32
  }
  func.func @transform_4(%arg0: i32) -> (i32, i32) {
    %c0_i32 = arith.constant 0 : i32
    %c0_i32_0 = arith.constant 0 : i32
    %c0_i32_1 = arith.constant 0 : i32
    return %c0_i32, %c0_i32_0 : i32, i32
  }
  func.func @transform_5(%arg0: i32) -> (i32, i32) {
    %c0_i32 = arith.constant 0 : i32
    %c0_i32_0 = arith.constant 0 : i32
    %c0_i32_1 = arith.constant 0 : i32
    return %c0_i32, %c0_i32_0 : i32, i32
  }
  func.func @transform_6(%arg0: i32) -> (i32, i32) {
    %c0_i32 = arith.constant 0 : i32
    %c0_i32_0 = arith.constant 0 : i32
    %c0_i32_1 = arith.constant 0 : i32
    return %c0_i32, %c0_i32_0 : i32, i32
  }
  func.func @transform_7(%arg0: i32) -> (i32, i32) {
    %c0_i32 = arith.constant 0 : i32
    %c0_i32_0 = arith.constant 0 : i32
    %c0_i32_1 = arith.constant 0 : i32
    return %c0_i32, %c0_i32_0 : i32, i32
  }
}

module attributes {stable_mosaic.version = 11 : i64} {
  func.func @_shrink_kernel(%arg0: i32, %arg1: i32, %arg2: memref<8x256xf32, #tpu.memory_space<vmem>>, %arg3: memref<8x1xf32, #tpu.memory_space<vmem>>, %arg4: memref<8x256xf32, #tpu.memory_space<vmem>>) attributes {dimension_semantics = [#tpu.dimension_semantics<parallel>, #tpu.dimension_semantics<parallel>], iteration_bounds = array<i64: 1, 1>, scalar_prefetch = 0 : i64, scratch_operands = 0 : i64, tpu.core_type = #tpu.core_type<tc>, window_params = [{transform_indices = @transform_0, window_bounds = array<i64: 8, 256>}, {transform_indices = @transform_1, window_bounds = array<i64: 8, 1>}, {transform_indices = @transform_2, window_bounds = array<i64: 8, 256>}]} {
    %c0 = arith.constant 0 : index
    %c0_0 = arith.constant 0 : index
    %0 = vector.load %arg2[%c0, %c0_0] : memref<8x256xf32, #tpu.memory_space<vmem>>, vector<8x256xf32>
    %c0_1 = arith.constant 0 : index
    %c0_2 = arith.constant 0 : index
    %1 = vector.load %arg3[%c0_1, %c0_2] : memref<8x1xf32, #tpu.memory_space<vmem>>, vector<8x1xf32>
    %cst = arith.constant 0.000000e+00 : f32
    %2 = vector.broadcast %cst : f32 to vector<8x1xf32>
    %3 = arith.subf %2, %1 : vector<8x1xf32>
    %4 = vector.broadcast %3 : vector<8x1xf32> to vector<8x256xf32>
    %5 = arith.maximumf %4, %0 : vector<8x256xf32>
    %6 = vector.broadcast %1 : vector<8x1xf32> to vector<8x256xf32>
    %7 = arith.minimumf %6, %5 : vector<8x256xf32>
    %8 = arith.subf %0, %7 : vector<8x256xf32>
    %c0_3 = arith.constant 0 : index
    %c0_4 = arith.constant 0 : index
    %9 = vector.load %arg4[%c0_3, %c0_4] : memref<8x256xf32, #tpu.memory_space<vmem>>, vector<8x256xf32>
    tpu.vector_store %arg4[%c0_3, %c0_4], %8 {strides = array<i32>} : memref<8x256xf32, #tpu.memory_space<vmem>>, vector<8x256xf32>,
    return
  }
  func.func @transform_0(%arg0: i32, %arg1: i32) -> (i32, i32) {
    %c0_i32 = arith.constant 0 : i32
    return %arg0, %arg1 : i32, i32
  }
  func.func @transform_1(%arg0: i32, %arg1: i32) -> (i32, i32) {
    %c0_i32 = arith.constant 0 : i32
    %c0_i32_0 = arith.constant 0 : i32
    return %arg0, %c0_i32 : i32, i32
  }
  func.func @transform_2(%arg0: i32, %arg1: i32) -> (i32, i32) {
    %c0_i32 = arith.constant 0 : i32
    return %arg0, %arg1 : i32, i32
  }
}

</mosaic_0001>

<llo_original>
// kernel: shrinkage_forward.3
$region0: #{shrinkage_forward.3}
  #allocation0 [shape = 'u32[]', space=smem, size = 0x4, offset = 0x4, fixed_abs, tag = 'smem constant byte address 0x4 - core index']
  #allocation1 [shape = 'u32[144,128]{1,0:T(1,128)}', space=vmem, size = 0x12000, scoped, tag = 'internal scratch']
  #allocation2 [shape = 'f32[8,1]{1,0:T(8,128)}', space=vmem, size = 0x1000, scoped, tag = 'scratch operand']
  %s0 = inlined_call_operand.vmem [shape: f32[8,256], index: 0, kind: input, shape index: {}]
  %s1 = inlined_call_operand.vmem [shape: f32[8,1], index: 1, kind: output, shape index: {}]
  %s2 = sld [smem:[#allocation0]]
  $region22: #{shrinkage_forward.3} parent=0
    _
  %s4 = ssub.s32 1, %s2
  %s5 = scalar_select 0, %s4, %s2
  // Predicated region
  $region2: #{shrinkage_forward.3} parent=0 // pred_check
    _
  $region3: #{shrinkage_forward.3} parent=0 // pred_check_branch
    %7 = sbr.rel (0) target = $region5
  $region4: #{shrinkage_forward.3} parent=0 // pred_region
    _
  $region5: #{shrinkage_forward.3} parent=0 // pred_fallthru
    _
  %p8 = scmp.eq.s32.totalorder 0, 0
  // Predicated region
  $region6: #{shrinkage_forward.3} parent=0 // pred_check
    %p9 = pneg %p8
  $region7: #{shrinkage_forward.3} parent=0 // pred_check_branch
    %11 = sbr.rel (%p9) target = $region9
  $region8: #{shrinkage_forward.3} parent=0 // pred_region
    %vm12 = vcmask 7168
    %13 = vst.msk [vmem:[#allocation2] sm:$0xff] %vm12, 0.0
  $region9: #{shrinkage_forward.3} parent=0 // pred_fallthru
    _
  %v14 = vld [vmem:[%s0] sm:$0xff]
  %v15 = vld [vmem:[%s0 + $0x8] sm:$0xff]
  %v16 = vand.u32 2147483647, %v14
  %v17 = vand.u32 2147483647, %v15
  %v18 = vld [vmem:[#allocation2] sm:$0xff]
  %v19 = vadd.f32 %v16, %v17
  %20 = vadd.xlane.f32.xlu0 %v19
  %v21 = vpop.xlane.xlu0 %20
  %v22 = vadd.f32 %v18, %v21
  %vm23 = vcmask 7168
  %24 = vst.msk [vmem:[#allocation2] sm:$0xff] %vm23, %v22
  // Predicated region
  $region10: #{shrinkage_forward.3} parent=0 // pred_check
    %p25 = pneg %p8
  $region11: #{shrinkage_forward.3} parent=0 // pred_check_branch
    %27 = sbr.rel (%p25) target = $region13
  $region12: #{shrinkage_forward.3} parent=0 // pred_region
    %v28 = vld [vmem:[#allocation2] sm:$0xff]
    %v29 = vmul.f32 %v28, 0.00390625
    %30 = vst.msk [vmem:[%s1] sm:$0xff] %vm23, %v29
  $region13: #{shrinkage_forward.3} parent=0 // pred_fallthru
    _
  // Predicated region
  $region14: #{shrinkage_forward.3} parent=0 // pred_check
    _
  $region15: #{shrinkage_forward.3} parent=0 // pred_check_branch
    %32 = sbr.rel (0) target = $region17
  $region16: #{shrinkage_forward.3} parent=0 // pred_region
    _
  $region17: #{shrinkage_forward.3} parent=0 // pred_fallthru
    _
  // Predicated region
  $region18: #{shrinkage_forward.3} parent=0 // pred_check
    _
  $region19: #{shrinkage_forward.3} parent=0 // pred_check_branch
    %34 = sbr.rel (0) target = $region21
  $region20: #{shrinkage_forward.3} parent=0 // pred_region
    _
  $region21: #{shrinkage_forward.3} parent=0 // pred_fallthru
    _

// kernel: shrinkage_forward.4
$region0: #{shrinkage_forward.4}
  #allocation0 [shape = 'u32[]', space=smem, size = 0x4, offset = 0x4, fixed_abs, tag = 'smem constant byte address 0x4 - core index']
  #allocation1 [shape = 'u32[144,128]{1,0:T(1,128)}', space=vmem, size = 0x12000, scoped, tag = 'internal scratch']
  %s0 = inlined_call_operand.vmem [shape: f32[2,4], index: 0, kind: input, shape index: {}]
  %s1 = inlined_call_operand.vmem [shape: f32[4,4], index: 1, kind: input, shape index: {}]
  %s2 = inlined_call_operand.vmem [shape: f32[1,4], index: 2, kind: input, shape index: {}]
  %s3 = inlined_call_operand.vmem [shape: f32[1,4], index: 3, kind: input, shape index: {}]
  %s4 = inlined_call_operand.vmem [shape: f32[1,4], index: 4, kind: input, shape index: {}]
  %s5 = inlined_call_operand.vmem [shape: f32[4,4], index: 5, kind: input, shape index: {}]
  %s6 = inlined_call_operand.vmem [shape: f32[1,4], index: 6, kind: input, shape index: {}]
  %s7 = inlined_call_operand.vmem [shape: f32[2,4], index: 7, kind: output, shape index: {}]
  %s8 = sld [smem:[#allocation0]]
  $region38: #{shrinkage_forward.4} parent=0
    _
  %s10 = ssub.s32 1, %s8
  %s11 = scalar_select 0, %s10, %s8
  // Predicated region
  $region2: #{shrinkage_forward.4} parent=0 // pred_check
    _
  $region3: #{shrinkage_forward.4} parent=0 // pred_check_branch
    %13 = sbr.rel (0) target = $region5
  $region4: #{shrinkage_forward.4} parent=0 // pred_region
    _
  $region5: #{shrinkage_forward.4} parent=0 // pred_fallthru
    _
  // Predicated region
  $region6: #{shrinkage_forward.4} parent=0 // pred_check
    _
  $region7: #{shrinkage_forward.4} parent=0 // pred_check_branch
    %15 = sbr.rel (0) target = $region9
  $region8: #{shrinkage_forward.4} parent=0 // pred_region
    _
  $region9: #{shrinkage_forward.4} parent=0 // pred_fallthru
    _
  // Predicated region
  $region10: #{shrinkage_forward.4} parent=0 // pred_check
    _
  $region11: #{shrinkage_forward.4} parent=0 // pred_check_branch
    %17 = sbr.rel (0) target = $region13
  $region12: #{shrinkage_forward.4} parent=0 // pred_region
    _
  $region13: #{shrinkage_forward.4} parent=0 // pred_fallthru
    _
  // Predicated region
  $region14: #{shrinkage_forward.4} parent=0 // pred_check
    _
  $region15: #{shrinkage_forward.4} parent=0 // pred_check_branch
    %19 = sbr.rel (0) target = $region17
  $region16: #{shrinkage_forward.4} parent=0 // pred_region
    _
  $region17: #{shrinkage_forward.4} parent=0 // pred_fallthru
    _
  // Predicated region
  $region18: #{shrinkage_forward.4} parent=0 // pred_check
    _
  $region19: #{shrinkage_forward.4} parent=0 // pred_check_branch
    %21 = sbr.rel (0) target = $region21
  $region20: #{shrinkage_forward.4} parent=0 // pred_region
    _
  $region21: #{shrinkage_forward.4} parent=0 // pred_fallthru
    _
  // Predicated region
  $region22: #{shrinkage_forward.4} parent=0 // pred_check
    _
  $region23: #{shrinkage_forward.4} parent=0 // pred_check_branch
    %23 = sbr.rel (0) target = $region25
  $region24: #{shrinkage_forward.4} parent=0 // pred_region
    _
  $region25: #{shrinkage_forward.4} parent=0 // pred_fallthru
    _
  // Predicated region
  $region26: #{shrinkage_forward.4} parent=0 // pred_check
    _
  $region27: #{shrinkage_forward.4} parent=0 // pred_check_branch
    %25 = sbr.rel (0) target = $region29
  $region28: #{shrinkage_forward.4} parent=0 // pred_region
    _
  $region29: #{shrinkage_forward.4} parent=0 // pred_fallthru
    _
  %v26 = vld [vmem:[%s0] sm:$0x3]
  %v27 = vld [vmem:[%s1] sm:$0xf]
  %v28 = vld [vmem:[%s2] sm:$0x1]
  %v30 = vlaneseq
  %v31 = vshrl.u32 %v30, 7
  %v32 = vsub.s32 0, %v31
  %v33 = vrot.slane %v28, %v32
  %vm35 = vcmask 31744
  %v37 = vsel %vm35, %v26, 0
  %vm39 = vcmask 1043456
  %v41 = vsel %vm39, %v27, 0
  %43 = vmatprep.subr.mxu0 0.0
  %44 = vmatpush1.msra.mxu0 %v41
  %45 = vmatprep.subr.mxu0 0.0
  %46 = vmatpush1.msra.mxu0 0.0
  %47 = vmatprep.subr.mxu0 0.0
  %48 = vmatpush1.msra.mxu0 0.0
  %49 = vmatprep.subr.mxu0 0.0
  %50 = vmatpush1.msra.mxu0 0.0
  %51 = vmatprep.subr.mxu0 0.0
  %52 = vmatpush1.msra.mxu0 0.0
  %53 = vmatprep.subr.mxu0 0.0
  %54 = vmatpush1.msra.mxu0 0.0
  %55 = vmatprep.subr.mxu0 0.0
  %56 = vmatpush1.msra.mxu0 0.0
  %57 = vmatprep.subr.mxu0 0.0
  %58 = vmatpush1.msra.mxu0 0.0
  %59 = vmatprep.subr.mxu0 0.0
  %60 = vmatpush1.msra.mxu0 0.0
  %61 = vmatprep.subr.mxu0 0.0
  %62 = vmatpush1.msra.mxu0 0.0
  %63 = vmatprep.subr.mxu0 0.0
  %64 = vmatpush1.msra.mxu0 0.0
  %65 = vmatprep.subr.mxu0 0.0
  %66 = vmatpush1.msra.mxu0 0.0
  %67 = vmatprep.subr.mxu0 0.0
  %68 = vmatpush1.msra.mxu0 0.0
  %69 = vmatprep.subr.mxu0 0.0
  %70 = vmatpush1.msra.mxu0 0.0
  %71 = vmatprep.subr.mxu0 0.0
  %72 = vmatpush1.msra.mxu0 0.0
  %73 = vmatprep.subr.mxu0 0.0
  %74 = vmatpush1.msra.mxu0 0.0
  %75 = vmatprep.subr.mxu0 0.0
  %76 = vmatpush1.msra.mxu0 0.0
  %77 = vmatprep.subr.mxu0 0.0
  %78 = vmatpush1.msra.mxu0 0.0
  %79 = vmatprep.subr.mxu0 0.0
  %80 = vmatpush1.msra.mxu0 0.0
  %81 = vmatprep.subr.mxu0 0.0
  %82 = vmatpush1.msra.mxu0 0.0
  %83 = vmatprep.subr.mxu0 0.0
  %84 = vmatpush1.msra.mxu0 0.0
  %85 = vmatprep.subr.mxu0 0.0
  %86 = vmatpush1.msra.mxu0 0.0
  %87 = vmatprep.subr.mxu0 0.0
  %88 = vmatpush1.msra.mxu0 0.0
  %89 = vmatprep.subr.mxu0 0.0
  %90 = vmatpush1.msra.mxu0 0.0
  %91 = vmatprep.subr.mxu0 0.0
  %92 = vmatpush1.msra.mxu0 0.0
  %93 = vmatprep.subr.mxu0 0.0
  %94 = vmatpush1.msra.mxu0 0.0
  %95 = vmatprep.subr.mxu0 0.0
  %96 = vmatpush1.msra.mxu0 0.0
  %97 = vmatprep.subr.mxu0 0.0
  %98 = vmatpush1.msra.mxu0 0.0
  %99 = vmatprep.subr.mxu0 0.0
  %100 = vmatpush1.msra.mxu0 0.0
  %101 = vmatprep.subr.mxu0 0.0
  %102 = vmatpush1.msra.mxu0 0.0
  %103 = vmatprep.subr.mxu0 0.0
  %104 = vmatpush1.msra.mxu0 0.0
  %105 = vmatprep.subr.mxu0 0.0
  %106 = vmatpush1.msra.mxu0 0.0
  %107 = vmatprep.mubr.f32.mxu0 0.0
  %108 = vmatmul.mubr.f32.gmra.mrb[0].mxu0 %v37
  %v109 = vpop.f32.mrb[0].mxu0
  %v110 = vadd.f32 %v33, %v109
  %v111 = vpop.f32.mrb[0].mxu0
  %112 = vdwg.mxu0
  %vm113 = vcmask 25600
  %v114 = vsel %vm113, %v110, 0.0
  %v115 = vrot.slane %v114, 4
  %v116 = vadd.f32 %v114, %v115
  %v117 = vrot.slane %v116, 2
  %v118 = vadd.f32 %v116, %v117
  %v119 = vrot.slane %v118, 1
  %v120 = vadd.f32 %v118, %v119
  %v121 = vrcp.pop 2.0
  %v122 = vmul.f32 %v120, %v121
  %v123 = vsub.f32 %v110, %v122
  %v124 = vmul.f32 %v123, %v123
  %v125 = vsel %vm113, %v124, 0.0
  %v126 = vrot.slane %v125, 4
  %v127 = vadd.f32 %v125, %v126
  %v128 = vrot.slane %v127, 2
  %v129 = vadd.f32 %v127, %v128
  %v130 = vrot.slane %v129, 1
  %v131 = vadd.f32 %v129, %v130
  %v132 = vmul.f32 %v131, %v121
  %v133 = vadd.f32 %v132, 1e-05
  %v134 = vrsqrt.pop %v133
  %v135 = vmul.f32 %v123, %v134
  %v136 = vld [vmem:[%s3] sm:$0x1]
  %v138 = vlaneseq
  %v139 = vshrl.u32 %v138, 7
  %v140 = vsub.s32 0, %v139
  %v141 = vrot.slane %v136, %v140
  %v143 = vmul.f32 %v135, %v141
  %v144 = vld [vmem:[%s4] sm:$0x1]
  %v146 = vlaneseq
  %v147 = vshrl.u32 %v146, 7
  %v148 = vsub.s32 0, %v147
  %v149 = vrot.slane %v144, %v148
  %v151 = vadd.f32 %v143, %v149
  %v152 = vmax.f32 %v151, 0.0
  %v153 = vld [vmem:[%s5] sm:$0xf]
  %v154 = vld [vmem:[%s6] sm:$0x1]
  %v156 = vlaneseq
  %v157 = vshrl.u32 %v156, 7
  %v158 = vsub.s32 0, %v157
  %v159 = vrot.slane %v154, %v158
  %v162 = vsel %vm35, %v152, 0
  %v165 = vsel %vm39, %v153, 0
  %167 = vmatprep.subr.mxu0 0.0
  %168 = vmatpush1.msra.mxu0 %v165
  %169 = vmatprep.subr.mxu0 0.0
  %170 = vmatpush1.msra.mxu0 0.0
  %171 = vmatprep.subr.mxu0 0.0
  %172 = vmatpush1.msra.mxu0 0.0
  %173 = vmatprep.subr.mxu0 0.0
  %174 = vmatpush1.msra.mxu0 0.0
  %175 = vmatprep.subr.mxu0 0.0
  %176 = vmatpush1.msra.mxu0 0.0
  %177 = vmatprep.subr.mxu0 0.0
  %178 = vmatpush1.msra.mxu0 0.0
  %179 = vmatprep.subr.mxu0 0.0
  %180 = vmatpush1.msra.mxu0 0.0
  %181 = vmatprep.subr.mxu0 0.0
  %182 = vmatpush1.msra.mxu0 0.0
  %183 = vmatprep.subr.mxu0 0.0
  %184 = vmatpush1.msra.mxu0 0.0
  %185 = vmatprep.subr.mxu0 0.0
  %186 = vmatpush1.msra.mxu0 0.0
  %187 = vmatprep.subr.mxu0 0.0
  %188 = vmatpush1.msra.mxu0 0.0
  %189 = vmatprep.subr.mxu0 0.0
  %190 = vmatpush1.msra.mxu0 0.0
  %191 = vmatprep.subr.mxu0 0.0
  %192 = vmatpush1.msra.mxu0 0.0
  %193 = vmatprep.subr.mxu0 0.0
  %194 = vmatpush1.msra.mxu0 0.0
  %195 = vmatprep.subr.mxu0 0.0
  %196 = vmatpush1.msra.mxu0 0.0
  %197 = vmatprep.subr.mxu0 0.0
  %198 = vmatpush1.msra.mxu0 0.0
  %199 = vmatprep.subr.mxu0 0.0
  %200 = vmatpush1.msra.mxu0 0.0
  %201 = vmatprep.subr.mxu0 0.0
  %202 = vmatpush1.msra.mxu0 0.0
  %203 = vmatprep.subr.mxu0 0.0
  %204 = vmatpush1.msra.mxu0 0.0
  %205 = vmatprep.subr.mxu0 0.0
  %206 = vmatpush1.msra.mxu0 0.0
  %207 = vmatprep.subr.mxu0 0.0
  %208 = vmatpush1.msra.mxu0 0.0
  %209 = vmatprep.subr.mxu0 0.0
  %210 = vmatpush1.msra.mxu0 0.0
  %211 = vmatprep.subr.mxu0 0.0
  %212 = vmatpush1.msra.mxu0 0.0
  %213 = vmatprep.subr.mxu0 0.0
  %214 = vmatpush1.msra.mxu0 0.0
  %215 = vmatprep.subr.mxu0 0.0
  %216 = vmatpush1.msra.mxu0 0.0
  %217 = vmatprep.subr.mxu0 0.0
  %218 = vmatpush1.msra.mxu0 0.0
  %219 = vmatprep.subr.mxu0 0.0
  %220 = vmatpush1.msra.mxu0 0.0
  %221 = vmatprep.subr.mxu0 0.0
  %222 = vmatpush1.msra.mxu0 0.0
  %223 = vmatprep.subr.mxu0 0.0
  %224 = vmatpush1.msra.mxu0 0.0
  %225 = vmatprep.subr.mxu0 0.0
  %226 = vmatpush1.msra.mxu0 0.0
  %227 = vmatprep.subr.mxu0 0.0
  %228 = vmatpush1.msra.mxu0 0.0
  %229 = vmatprep.subr.mxu0 0.0
  %230 = vmatpush1.msra.mxu0 0.0
  %231 = vmatprep.mubr.f32.mxu0 0.0
  %232 = vmatmul.mubr.f32.gmra.mrb[0].mxu0 %v162
  %v233 = vpop.f32.mrb[0].mxu0
  %v234 = vadd.f32 %v159, %v233
  %v235 = vpop.f32.mrb[0].mxu0
  %236 = vdwg.mxu0
  %v237 = vxor.u32 %v234, 2147483648
  %v238 = vmul.f32 %v237, 1.442695
  %v239 = vpow.pop %v238
  %v240 = vadd.f32 %v239, 1.0
  %v241 = vrcp.pop %v240
  %v242 = vmul.f32 1.0, %v241
  %v243 = vmul.f32 %v26, %v242
  %244 = vst.msk [vmem:[%s7] sm:$0x3] %vm113, %v243
  // Predicated region
  $region30: #{shrinkage_forward.4} parent=0 // pred_check
    _
  $region31: #{shrinkage_forward.4} parent=0 // pred_check_branch
    %246 = sbr.rel (0) target = $region33
  $region32: #{shrinkage_forward.4} parent=0 // pred_region
    _
  $region33: #{shrinkage_forward.4} parent=0 // pred_fallthru
    _
  // Predicated region
  $region34: #{shrinkage_forward.4} parent=0 // pred_check
    _
  $region35: #{shrinkage_forward.4} parent=0 // pred_check_branch
    %248 = sbr.rel (0) target = $region37
  $region36: #{shrinkage_forward.4} parent=0 // pred_region
    _
  $region37: #{shrinkage_forward.4} parent=0 // pred_fallthru
    _

// kernel: shrinkage_forward.5
$region0: #{shrinkage_forward.5}
  #allocation0 [shape = 'u32[]', space=smem, size = 0x4, offset = 0x4, fixed_abs, tag = 'smem constant byte address 0x4 - core index']
  #allocation1 [shape = 'u32[144,128]{1,0:T(1,128)}', space=vmem, size = 0x12000, scoped, tag = 'internal scratch']
  %s0 = inlined_call_operand.vmem [shape: f32[8,256], index: 0, kind: input, shape index: {}, may-alias: {0,2}]
  %s1 = inlined_call_operand.vmem [shape: f32[8,1], index: 1, kind: input, shape index: {}]
  %s2 = inlined_call_operand.vmem [shape: f32[8,256], index: 2, kind: output, shape index: {}, may-alias: {0,2}]
  %s3 = sld [smem:[#allocation0]]
  $region18: #{shrinkage_forward.5} parent=0
    _
  %s5 = ssub.s32 1, %s3
  %s6 = scalar_select 0, %s5, %s3
  // Predicated region
  $region2: #{shrinkage_forward.5} parent=0 // pred_check
    _
  $region3: #{shrinkage_forward.5} parent=0 // pred_check_branch
    %8 = sbr.rel (0) target = $region5
  $region4: #{shrinkage_forward.5} parent=0 // pred_region
    _
  $region5: #{shrinkage_forward.5} parent=0 // pred_fallthru
    _
  // Predicated region
  $region6: #{shrinkage_forward.5} parent=0 // pred_check
    _
  $region7: #{shrinkage_forward.5} parent=0 // pred_check_branch
    %10 = sbr.rel (0) target = $region9
  $region8: #{shrinkage_forward.5} parent=0 // pred_region
    _
  $region9: #{shrinkage_forward.5} parent=0 // pred_fallthru
    _
  %v11 = vld [vmem:[%s0] sm:$0xff]
  %v12 = vld [vmem:[%s0 + $0x8] sm:$0xff]
  %v13 = vld [vmem:[%s1] sm:$0xff]
  %v14 = vsub.f32 0.0, %v13
  %16 = vset.pattern.permute.xlu0 0
  %17 = vperm.xlu0 %16, %v14
  %v18 = vpop.permute.xlu0 %17
  %v20 = vmax.f32 %v18, %v11
  %v21 = vmax.f32 %v18, %v12
  %23 = vset.pattern.permute.xlu0 0
  %24 = vperm.xlu0 %23, %v13
  %v25 = vpop.permute.xlu0 %24
  %v27 = vmin.f32 %v25, %v20
  %v28 = vmin.f32 %v25, %v21
  %v29 = vsub.f32 %v11, %v27
  %v30 = vsub.f32 %v12, %v28
  %31 = vst [vmem:[%s2] sm:$0xff] %v29
  %32 = vst [vmem:[%s2 + $0x8] sm:$0xff] %v30
  // Predicated region
  $region10: #{shrinkage_forward.5} parent=0 // pred_check
    _
  $region11: #{shrinkage_forward.5} parent=0 // pred_check_branch
    %34 = sbr.rel (0) target = $region13
  $region12: #{shrinkage_forward.5} parent=0 // pred_region
    _
  $region13: #{shrinkage_forward.5} parent=0 // pred_fallthru
    _
  // Predicated region
  $region14: #{shrinkage_forward.5} parent=0 // pred_check
    _
  $region15: #{shrinkage_forward.5} parent=0 // pred_check_branch
    %36 = sbr.rel (0) target = $region17
  $region16: #{shrinkage_forward.5} parent=0 // pred_region
    _
  $region17: #{shrinkage_forward.5} parent=0 // pred_fallthru
    _

</llo_original>
